<compile_context>
chip_gen: v7x
topology: tpu7x:2x2x1
jax: 0.10.0
libtpu: 0.0.40
codegen_flags: <defaults>
</compile_context>

<pallas_src>
import functools
import numpy as np
import jax
import jax.numpy as jnp
from jax import lax
from jax.experimental import pallas as pl
from jax.experimental.pallas import tpu as pltpu


# ----------------------------- Pallas kernel -------------------------------

def _basic_block_kernel(x_ref, w1_ref, b1_ref, w2sc_ref, b2sc_ref, mask_ref,
                        o_ref, p1_ref, p2_ref, *, H, W):
    """Fused BasicBlock forward for one block of images.

    The column axis is n_imgs * H * W (images concatenated along GEMM columns).

    x_ref    : (Cin, cols)  f32   lane-dense input slab
    w1_ref   : (C, K1p)     bf16  conv1 weight, BN1 scale folded, tap-major K
    b1_ref   : (C, 1)       f32   folded BN1 bias
    w2sc_ref : (C, K2p)     bf16  [conv2 | 1x1 shortcut] weights, BN folded
    b2sc_ref : (C, 1)       f32   folded (BN2 + BN_sc) bias
    mask_ref : (9, cols)    f32   precomputed 0/1 halo masks per 3x3 tap
    o_ref    : (C, cols)    f32   lane-dense output slab
    p1_ref   : (K1p, cols)  bf16  VMEM scratch: stage-1 im2col patches
    p2_ref   : (K2p, cols)  bf16  VMEM scratch: stage-2 patches + shortcut rows
    """
    Cin, cols = x_ref.shape
    C = w1_ref.shape[0]
    K1p, K2p = p1_ref.shape[0], p2_ref.shape[0]
    cdt = p1_ref.dtype

    def im2col(src, dst_ref, n_ch):
        # 9 shifted taps of `src` along the flat spatial axis.  The roll is
        # circular, so destination positions whose 3x3 neighbour falls outside
        # the image (or in the next image) are zeroed with the 0/1 border
        # mask.  Stores are full-lane (cols % 128 == 0) and bf16.
        for kh in range(3):
            for kw in range(3):
                t = kh * 3 + kw
                d = (kh - 1) * W + (kw - 1)          # flat halo shift
                tap = src if d == 0 else pltpu.roll(src, (-d) % cols, 1)
                if t != 4:                           # centre tap: nothing to mask
                    tap = tap * mask_ref[t:t + 1, :]
                dst_ref[t * n_ch:(t + 1) * n_ch, :] = tap.astype(cdt)

    x = x_ref[...]                                   # (Cin, cols) f32

    # ---- stage 1: conv1 (3x3, pad=1) + BN1 (scale folded in w1) + ReLU -----
    im2col(x, p1_ref, Cin)
    if K1p > 9 * Cin:                                # zero only the K-pad rows
        p1_ref[9 * Cin:, :] = jnp.zeros((K1p - 9 * Cin, cols), cdt)
    y = jnp.dot(w1_ref[...], p1_ref[...], preferred_element_type=jnp.float32)
    y = jnp.maximum(y + b1_ref[...], 0.0)            # (C, cols) f32 epilogue

    # ---- stage 2: conv2 + BN2, fused 1x1 shortcut + BN_sc (extra K rows),
    #      residual add inside the GEMM, then ReLU ---------------------------
    im2col(y, p2_ref, C)
    p2_ref[9 * C:9 * C + Cin, :] = x.astype(cdt)     # shortcut input rows
    if K2p > 9 * C + Cin:
        p2_ref[9 * C + Cin:, :] = jnp.zeros((K2p - (9 * C + Cin), cols), cdt)
    out = jnp.dot(w2sc_ref[...], p2_ref[...], preferred_element_type=jnp.float32)
    o_ref[...] = jnp.maximum(out + b2sc_ref[...], 0.0).astype(o_ref.dtype)


# ------------------------------- wrappers -----------------------------------

def _round_up(x, m):
    return (x + m - 1) // m * m


def _fold_bn(gamma, beta, mean, var, eps=1e-5):
    scale = gamma / jnp.sqrt(var + eps)
    bias = beta - mean * scale
    return scale, bias


def _tap_masks(H, W, n_imgs):
    """Static 0/1 masks (one per 3x3 tap) zeroing the out-of-image halo that a
    circular roll along the flat spatial axis would otherwise pull in."""
    hw = H * W
    r = np.arange(hw) // W
    c = np.arange(hw) % W
    masks = np.empty((9, hw), np.float32)
    for kh in range(3):
        for kw in range(3):
            dh, dw = kh - 1, kw - 1
            ok = (r + dh >= 0) & (r + dh < H) & (c + dw >= 0) & (c + dw < W)
            masks[kh * 3 + kw] = ok.astype(np.float32)
    return jnp.asarray(np.tile(masks, (1, n_imgs)))


def _prepare_weights(params, matmul_dtype):
    """Fold eval-mode BN scales into the conv weights and lay them out as
    (Cout, K) GEMM operands whose K ordering matches the in-kernel im2col
    (tap-major: K = (kh*3+kw)*C_src + c_src; shortcut channels appended last).
    K is zero-padded to a multiple of 16 (bf16 sublane tile)."""
    w1, w2, wsc = params["w1"], params["w2"], params["w_sc"]
    s1, b1 = _fold_bn(*params["bn1"])
    s2, b2 = _fold_bn(*params["bn2"])
    ssc, bsc = _fold_bn(*params["bn_sc"])
    _, _, Cin, C = w1.shape

    w1_eff = jnp.transpose(w1 * s1, (3, 0, 1, 2)).reshape(C, 9 * Cin)
    w2_eff = jnp.transpose(w2 * s2, (3, 0, 1, 2)).reshape(C, 9 * C)
    wsc_eff = jnp.transpose(wsc * ssc, (1, 0))              # (C, Cin)
    w2sc = jnp.concatenate([w2_eff, wsc_eff], axis=1)       # (C, 9*C + Cin)

    K1p = _round_up(9 * Cin, 16)
    K2p = _round_up(9 * C + Cin, 16)
    w1_eff = jnp.pad(w1_eff, ((0, 0), (0, K1p - 9 * Cin)))
    w2sc = jnp.pad(w2sc, ((0, 0), (0, K2p - (9 * C + Cin))))

    return (w1_eff.astype(matmul_dtype), b1.reshape(C, 1),
            w2sc.astype(matmul_dtype), (b2 + bsc).reshape(C, 1))


def basic_block_forward(x_nchw, params, stride=1, matmul_dtype=jnp.bfloat16,
                        imgs_per_step=None):
    """BasicBlock(in_planes, planes, stride=1, use_bn=True) forward, NCHW I/O."""
    if stride != 1:
        raise NotImplementedError("only stride=1 BasicBlocks are implemented")
    N, Cin, H, W = x_nchw.shape
    HW = H * W
    w1_eff, b1, w2sc, b2sc = _prepare_weights(params, matmul_dtype)
    C = w1_eff.shape[0]
    K1p, K2p = w1_eff.shape[1], w2sc.shape[1]

    if imgs_per_step is None:
        # Keep >=2 parallel grid steps (both v7x TensorCores get work); batch
        # any further images into the GEMM column axis to amortize the
        # ~0.35us/grid-step pipeline overhead and widen the MXU columns.
        imgs_per_step = max(1, N // 2)
    while N % imgs_per_step:
        imgs_per_step -= 1
    NB = imgs_per_step
    COLS = NB * HW
    steps = N // NB

    # Lay the batch along the GEMM column axis: (Cin, N*H*W), lane-dense.
    x_cols = jnp.transpose(x_nchw.reshape(N, Cin, HW), (1, 0, 2)).reshape(Cin, N * HW)
    tapmask = _tap_masks(H, W, NB)                           # (9, COLS) f32

    kern = functools.partial(_basic_block_kernel, H=H, W=W)

    # VMEM budget from actual block / scratch sizes (I/O blocks double-buffered
    # by the pipeline), with 2x headroom and a generous floor for Mosaic
    # internal scratch.  Stays far under every generation's physical VMEM.
    f32b = 4
    mmb = jnp.dtype(matmul_dtype).itemsize
    io_bytes = (Cin * COLS * f32b + C * COLS * f32b + 9 * COLS * f32b
                + C * (K1p + K2p) * mmb + 2 * C * f32b)
    scr_bytes = (K1p + K2p) * COLS * mmb
    vmem_limit = int(max(2 * (2 * io_bytes + scr_bytes), 4 * 1024 * 1024))

    out_cols = pl.pallas_call(
        kern,
        out_shape=jax.ShapeDtypeStruct((C, N * HW), x_nchw.dtype),
        grid=(steps,),
        in_specs=[
            pl.BlockSpec((Cin, COLS), lambda n: (0, n)),
            pl.BlockSpec((C, K1p), lambda n: (0, 0)),
            pl.BlockSpec((C, 1), lambda n: (0, 0)),
            pl.BlockSpec((C, K2p), lambda n: (0, 0)),
            pl.BlockSpec((C, 1), lambda n: (0, 0)),
            pl.BlockSpec((9, COLS), lambda n: (0, 0)),
        ],
        out_specs=pl.BlockSpec((C, COLS), lambda n: (0, n)),
        scratch_shapes=[
            pltpu.VMEM((K1p, COLS), matmul_dtype),
            pltpu.VMEM((K2p, COLS), matmul_dtype),
        ],
        compiler_params=pltpu.CompilerParams(
            dimension_semantics=("parallel",),
            vmem_limit_bytes=vmem_limit),
    )(x_cols, w1_eff, b1, w2sc, b2sc, tapmask)

    # (C, N*HW) -> (N, C, H, W)
    return jnp.transpose(out_cols.reshape(C, N, HW), (1, 0, 2)).reshape(N, C, H, W)


# ------------------------------ pure-JAX ref ---------------------------------

def basic_block_reference(x_nchw, params):
    dn = ("NHWC", "HWIO", "NHWC")
    eps = 1e-5

    def bn(y, g, b, m, v):
        return (y - m) / jnp.sqrt(v + eps) * g + b

    x = jnp.transpose(x_nchw, (0, 2, 3, 1))
    y = lax.conv_general_dilated(x, params["w1"], (1, 1), "SAME",
                                 dimension_numbers=dn)
    y = jax.nn.relu(bn(y, *params["bn1"]))
    y = lax.conv_general_dilated(y, params["w2"], (1, 1), "SAME",
                                 dimension_numbers=dn)
    y = bn(y, *params["bn2"])
    sc = lax.conv_general_dilated(x, params["w_sc"].reshape(
        1, 1, *params["w_sc"].shape), (1, 1), "SAME", dimension_numbers=dn)
    sc = bn(sc, *params["bn_sc"])
    out = jax.nn.relu(y + sc)
    return jnp.transpose(out, (0, 3, 1, 2))


# ---------------------------------- main -------------------------------------

if __name__ == "__main__":
    # Module config: BasicBlock(in_planes=4, planes=8, stride=1, use_bn=True)
    # -> projection shortcut active (in_planes != planes).
    N, Cin, H, W = 2, 4, 16, 16
    planes = 8

    key = jax.random.PRNGKey(0)
    ks = jax.random.split(key, 8)

    def bn_params(k, c):
        k1, k2, k3, k4 = jax.random.split(k, 4)
        gamma = 1.0 + 0.1 * jax.random.normal(k1, (c,), jnp.float32)
        beta = 0.1 * jax.random.normal(k2, (c,), jnp.float32)
        mean = 0.1 * jax.random.normal(k3, (c,), jnp.float32)
        var = 1.0 + 0.1 * jnp.abs(jax.random.normal(k4, (c,), jnp.float32))
        return (gamma, beta, mean, var)

    params = {
        # conv weights in HWIO layout; 1x1 shortcut as (Cin, Cout)
        "w1": 0.2 * jax.random.normal(ks[0], (3, 3, Cin, planes), jnp.float32),
        "w2": 0.2 * jax.random.normal(ks[1], (3, 3, planes, planes), jnp.float32),
        "w_sc": 0.2 * jax.random.normal(ks[2], (Cin, planes), jnp.float32),
        "bn1": bn_params(ks[3], planes),
        "bn2": bn_params(ks[4], planes),
        "bn_sc": bn_params(ks[5], planes),
    }

    x = jax.random.normal(ks[6], (N, Cin, H, W), jnp.float32)  # NCHW like torch

    fwd = jax.jit(basic_block_forward)
    out = jax.block_until_ready(fwd(x, params))
    ref = jax.block_until_ready(basic_block_reference(x, params))

    assert out.shape == (N, planes, H, W), out.shape
    # Tolerance sized for bf16 matmul operands (f32 accumulation); the pure-JAX
    # reference is full f32, so expect ~2^-8 relative error per conv stage.
    np.testing.assert_allclose(np.asarray(out), np.asarray(ref),
                               rtol=5e-2, atol=5e-2)
    print("KERNEL_OK")
</pallas_src>

<mosaic_0001>
module attributes {stable_mosaic.version = 11 : i64} {
  func.func @_basic_block_kernel(%arg0: i32, %arg1: memref<4x256xf32, #tpu.memory_space<vmem>>, %arg2: memref<8x48xbf16, #tpu.memory_space<vmem>>, %arg3: memref<8x1xf32, #tpu.memory_space<vmem>>, %arg4: memref<8x80xbf16, #tpu.memory_space<vmem>>, %arg5: memref<8x1xf32, #tpu.memory_space<vmem>>, %arg6: memref<9x256xf32, #tpu.memory_space<vmem>>, %arg7: memref<8x256xf32, #tpu.memory_space<vmem>>, %arg8: memref<48x256xbf16, #tpu.memory_space<vmem>>, %arg9: memref<80x256xbf16, #tpu.memory_space<vmem>>) attributes {dimension_semantics = [#tpu.dimension_semantics<parallel>], iteration_bounds = array<i64: 2>, scalar_prefetch = 0 : i64, scratch_operands = 2 : i64, tpu.core_type = #tpu.core_type<tc>, window_params = [{transform_indices = @transform_0, window_bounds = array<i64: 4, 256>}, {pipeline_mode = #tpu.pipeline_mode<synchronous>, transform_indices = @transform_1, window_bounds = array<i64: 8, 48>}, {pipeline_mode = #tpu.pipeline_mode<synchronous>, transform_indices = @transform_2, window_bounds = array<i64: 8, 1>}, {pipeline_mode = #tpu.pipeline_mode<synchronous>, transform_indices = @transform_3, window_bounds = array<i64: 8, 80>}, {pipeline_mode = #tpu.pipeline_mode<synchronous>, transform_indices = @transform_4, window_bounds = array<i64: 8, 1>}, {pipeline_mode = #tpu.pipeline_mode<synchronous>, transform_indices = @transform_5, window_bounds = array<i64: 9, 256>}, {transform_indices = @transform_6, window_bounds = array<i64: 8, 256>}]} {
    %c0 = arith.constant 0 : index
    %c0_0 = arith.constant 0 : index
    %0 = vector.load %arg1[%c0, %c0_0] : memref<4x256xf32, #tpu.memory_space<vmem>>, vector<4x256xf32>
    %c17_i32 = arith.constant 17 : i32
    %1 = tpu.dynamic_rotate %0 by %c17_i32 dim 1 : vector<4x256xf32>, i32 -> vector<4x256xf32>
    %c0_1 = arith.constant 0 : index
    %c0_2 = arith.constant 0 : index
    %2 = vector.load %arg6[%c0_1, %c0_2] : memref<9x256xf32, #tpu.memory_space<vmem>>, vector<1x256xf32>
    %3 = vector.broadcast %2 : vector<1x256xf32> to vector<4x256xf32>
    %4 = arith.mulf %1, %3 : vector<4x256xf32>
    %5 = arith.truncf %4 : vector<4x256xf32> to vector<4x256xbf16>
    %c0_3 = arith.constant 0 : index
    %c0_4 = arith.constant 0 : index
    %6 = vector.load %arg8[%c0_3, %c0_4] : memref<48x256xbf16, #tpu.memory_space<vmem>>, vector<4x256xbf16>
    tpu.vector_store %arg8[%c0_3, %c0_4], %5 {strides = array<i32>} : memref<48x256xbf16, #tpu.memory_space<vmem>>, vector<4x256xbf16>,
    %c16_i32 = arith.constant 16 : i32
    %7 = tpu.dynamic_rotate %0 by %c16_i32 dim 1 : vector<4x256xf32>, i32 -> vector<4x256xf32>
    %c1 = arith.constant 1 : index
    %c0_5 = arith.constant 0 : index
    %8 = vector.load %arg6[%c1, %c0_5] : memref<9x256xf32, #tpu.memory_space<vmem>>, vector<1x256xf32>
    %9 = vector.broadcast %8 : vector<1x256xf32> to vector<4x256xf32>
    %10 = arith.mulf %7, %9 : vector<4x256xf32>
    %11 = arith.truncf %10 : vector<4x256xf32> to vector<4x256xbf16>
    %c4 = arith.constant 4 : index
    %c0_6 = arith.constant 0 : index
    %12 = vector.load %arg8[%c4, %c0_6] : memref<48x256xbf16, #tpu.memory_space<vmem>>, vector<4x256xbf16>
    tpu.vector_store %arg8[%c4, %c0_6], %11 {strides = array<i32>} : memref<48x256xbf16, #tpu.memory_space<vmem>>, vector<4x256xbf16>,
    %c15_i32 = arith.constant 15 : i32
    %13 = tpu.dynamic_rotate %0 by %c15_i32 dim 1 : vector<4x256xf32>, i32 -> vector<4x256xf32>
    %c2 = arith.constant 2 : index
    %c0_7 = arith.constant 0 : index
    %14 = vector.load %arg6[%c2, %c0_7] : memref<9x256xf32, #tpu.memory_space<vmem>>, vector<1x256xf32>
    %15 = vector.broadcast %14 : vector<1x256xf32> to vector<4x256xf32>
    %16 = arith.mulf %13, %15 : vector<4x256xf32>
    %17 = arith.truncf %16 : vector<4x256xf32> to vector<4x256xbf16>
    %c8 = arith.constant 8 : index
    %c0_8 = arith.constant 0 : index
    %18 = vector.load %arg8[%c8, %c0_8] : memref<48x256xbf16, #tpu.memory_space<vmem>>, vector<4x256xbf16>
    tpu.vector_store %arg8[%c8, %c0_8], %17 {strides = array<i32>} : memref<48x256xbf16, #tpu.memory_space<vmem>>, vector<4x256xbf16>,
    %c1_i32 = arith.constant 1 : i32
    %19 = tpu.dynamic_rotate %0 by %c1_i32 dim 1 : vector<4x256xf32>, i32 -> vector<4x256xf32>
    %c3 = arith.constant 3 : index
    %c0_9 = arith.constant 0 : index
    %20 = vector.load %arg6[%c3, %c0_9] : memref<9x256xf32, #tpu.memory_space<vmem>>, vector<1x256xf32>
    %21 = vector.broadcast %20 : vector<1x256xf32> to vector<4x256xf32>
    %22 = arith.mulf %19, %21 : vector<4x256xf32>
    %23 = arith.truncf %22 : vector<4x256xf32> to vector<4x256xbf16>
    %c12 = arith.constant 12 : index
    %c0_10 = arith.constant 0 : index
    %24 = vector.load %arg8[%c12, %c0_10] : memref<48x256xbf16, #tpu.memory_space<vmem>>, vector<4x256xbf16>
    tpu.vector_store %arg8[%c12, %c0_10], %23 {strides = array<i32>} : memref<48x256xbf16, #tpu.memory_space<vmem>>, vector<4x256xbf16>,
    %25 = arith.truncf %0 : vector<4x256xf32> to vector<4x256xbf16>
    %c16 = arith.constant 16 : index
    %c0_11 = arith.constant 0 : index
    %26 = vector.load %arg8[%c16, %c0_11] : memref<48x256xbf16, #tpu.memory_space<vmem>>, vector<4x256xbf16>
    tpu.vector_store %arg8[%c16, %c0_11], %25 {strides = array<i32>} : memref<48x256xbf16, #tpu.memory_space<vmem>>, vector<4x256xbf16>,
    %c255_i32 = arith.constant 255 : i32
    %27 = tpu.dynamic_rotate %0 by %c255_i32 dim 1 : vector<4x256xf32>, i32 -> vector<4x256xf32>
    %c5 = arith.constant 5 : index
    %c0_12 = arith.constant 0 : index
    %28 = vector.load %arg6[%c5, %c0_12] : memref<9x256xf32, #tpu.memory_space<vmem>>, vector<1x256xf32>
    %29 = vector.broadcast %28 : vector<1x256xf32> to vector<4x256xf32>
    %30 = arith.mulf %27, %29 : vector<4x256xf32>
    %31 = arith.truncf %30 : vector<4x256xf32> to vector<4x256xbf16>
    %c20 = arith.constant 20 : index
    %c0_13 = arith.constant 0 : index
    %32 = vector.load %arg8[%c20, %c0_13] : memref<48x256xbf16, #tpu.memory_space<vmem>>, vector<4x256xbf16>
    tpu.vector_store %arg8[%c20, %c0_13], %31 {strides = array<i32>} : memref<48x256xbf16, #tpu.memory_space<vmem>>, vector<4x256xbf16>,
    %c241_i32 = arith.constant 241 : i32
    %33 = tpu.dynamic_rotate %0 by %c241_i32 dim 1 : vector<4x256xf32>, i32 -> vector<4x256xf32>
    %c6 = arith.constant 6 : index
    %c0_14 = arith.constant 0 : index
    %34 = vector.load %arg6[%c6, %c0_14] : memref<9x256xf32, #tpu.memory_space<vmem>>, vector<1x256xf32>
    %35 = vector.broadcast %34 : vector<1x256xf32> to vector<4x256xf32>
    %36 = arith.mulf %33, %35 : vector<4x256xf32>
    %37 = arith.truncf %36 : vector<4x256xf32> to vector<4x256xbf16>
    %c24 = arith.constant 24 : index
    %c0_15 = arith.constant 0 : index
    %38 = vector.load %arg8[%c24, %c0_15] : memref<48x256xbf16, #tpu.memory_space<vmem>>, vector<4x256xbf16>
    tpu.vector_store %arg8[%c24, %c0_15], %37 {strides = array<i32>} : memref<48x256xbf16, #tpu.memory_space<vmem>>, vector<4x256xbf16>,
    %c240_i32 = arith.constant 240 : i32
    %39 = tpu.dynamic_rotate %0 by %c240_i32 dim 1 : vector<4x256xf32>, i32 -> vector<4x256xf32>
    %c7 = arith.constant 7 : index
    %c0_16 = arith.constant 0 : index
    %40 = vector.load %arg6[%c7, %c0_16] : memref<9x256xf32, #tpu.memory_space<vmem>>, vector<1x256xf32>
    %41 = vector.broadcast %40 : vector<1x256xf32> to vector<4x256xf32>
    %42 = arith.mulf %39, %41 : vector<4x256xf32>
    %43 = arith.truncf %42 : vector<4x256xf32> to vector<4x256xbf16>
    %c28 = arith.constant 28 : index
    %c0_17 = arith.constant 0 : index
    %44 = vector.load %arg8[%c28, %c0_17] : memref<48x256xbf16, #tpu.memory_space<vmem>>, vector<4x256xbf16>
    tpu.vector_store %arg8[%c28, %c0_17], %43 {strides = array<i32>} : memref<48x256xbf16, #tpu.memory_space<vmem>>, vector<4x256xbf16>,
    %c239_i32 = arith.constant 239 : i32
    %45 = tpu.dynamic_rotate %0 by %c239_i32 dim 1 : vector<4x256xf32>, i32 -> vector<4x256xf32>
    %c8_18 = arith.constant 8 : index
    %c0_19 = arith.constant 0 : index
    %46 = vector.load %arg6[%c8_18, %c0_19] : memref<9x256xf32, #tpu.memory_space<vmem>>, vector<1x256xf32>
    %47 = vector.broadcast %46 : vector<1x256xf32> to vector<4x256xf32>
    %48 = arith.mulf %45, %47 : vector<4x256xf32>
    %49 = arith.truncf %48 : vector<4x256xf32> to vector<4x256xbf16>
    %c32 = arith.constant 32 : index
    %c0_20 = arith.constant 0 : index
    %50 = vector.load %arg8[%c32, %c0_20] : memref<48x256xbf16, #tpu.memory_space<vmem>>, vector<4x256xbf16>
    tpu.vector_store %arg8[%c32, %c0_20], %49 {strides = array<i32>} : memref<48x256xbf16, #tpu.memory_space<vmem>>, vector<4x256xbf16>,
    %cst = arith.constant 0.000000e+00 : bf16
    %51 = vector.broadcast %cst : bf16 to vector<12x256xbf16>
    %c36 = arith.constant 36 : index
    %c0_21 = arith.constant 0 : index
    %52 = vector.load %arg8[%c36, %c0_21] : memref<48x256xbf16, #tpu.memory_space<vmem>>, vector<12x256xbf16>
    tpu.vector_store %arg8[%c36, %c0_21], %51 {strides = array<i32>} : memref<48x256xbf16, #tpu.memory_space<vmem>>, vector<12x256xbf16>,
    %c0_22 = arith.constant 0 : index
    %c0_23 = arith.constant 0 : index
    %53 = vector.load %arg2[%c0_22, %c0_23] : memref<8x48xbf16, #tpu.memory_space<vmem>>, vector<8x48xbf16>
    %c0_24 = arith.constant 0 : index
    %c0_25 = arith.constant 0 : index
    %54 = vector.load %arg8[%c0_24, %c0_25] : memref<48x256xbf16, #tpu.memory_space<vmem>>, vector<48x256xbf16>
    %cst_26 = arith.constant dense<0.000000e+00> : vector<8x256xf32>
    %55 = tpu.matmul %53, %54, %cst_26 {dimension_numbers = #tpu.dot_dimension_numbers<[1], [0], [0], [1], [0, 0, 1, 1], [], []>} : vector<8x48xbf16>, vector<48x256xbf16>, vector<8x256xf32> -> vector<8x256xf32>
    %c0_27 = arith.constant 0 : index
    %c0_28 = arith.constant 0 : index
    %56 = vector.load %arg3[%c0_27, %c0_28] : memref<8x1xf32, #tpu.memory_space<vmem>>, vector<8x1xf32>
    %57 = vector.broadcast %56 : vector<8x1xf32> to vector<8x256xf32>
    %58 = arith.addf %55, %57 : vector<8x256xf32>
    %cst_29 = arith.constant 0.000000e+00 : f32
    %59 = vector.broadcast %cst_29 : f32 to vector<8x256xf32>
    %60 = arith.maximumf %58, %59 : vector<8x256xf32>
    %c17_i32_30 = arith.constant 17 : i32
    %61 = tpu.dynamic_rotate %60 by %c17_i32_30 dim 1 : vector<8x256xf32>, i32 -> vector<8x256xf32>
    %c0_31 = arith.constant 0 : index
    %c0_32 = arith.constant 0 : index
    %62 = vector.load %arg6[%c0_31, %c0_32] : memref<9x256xf32, #tpu.memory_space<vmem>>, vector<1x256xf32>
    %63 = vector.broadcast %62 : vector<1x256xf32> to vector<8x256xf32>
    %64 = arith.mulf %61, %63 : vector<8x256xf32>
    %65 = arith.truncf %64 : vector<8x256xf32> to vector<8x256xbf16>
    %c0_33 = arith.constant 0 : index
    %c0_34 = arith.constant 0 : index
    %66 = vector.load %arg9[%c0_33, %c0_34] : memref<80x256xbf16, #tpu.memory_space<vmem>>, vector<8x256xbf16>
    tpu.vector_store %arg9[%c0_33, %c0_34], %65 {strides = array<i32>} : memref<80x256xbf16, #tpu.memory_space<vmem>>, vector<8x256xbf16>,
    %c16_i32_35 = arith.constant 16 : i32
    %67 = tpu.dynamic_rotate %60 by %c16_i32_35 dim 1 : vector<8x256xf32>, i32 -> vector<8x256xf32>
    %c1_36 = arith.constant 1 : index
    %c0_37 = arith.constant 0 : index
    %68 = vector.load %arg6[%c1_36, %c0_37] : memref<9x256xf32, #tpu.memory_space<vmem>>, vector<1x256xf32>
    %69 = vector.broadcast %68 : vector<1x256xf32> to vector<8x256xf32>
    %70 = arith.mulf %67, %69 : vector<8x256xf32>
    %71 = arith.truncf %70 : vector<8x256xf32> to vector<8x256xbf16>
    %c8_38 = arith.constant 8 : index
    %c0_39 = arith.constant 0 : index
    %72 = vector.load %arg9[%c8_38, %c0_39] : memref<80x256xbf16, #tpu.memory_space<vmem>>, vector<8x256xbf16>
    tpu.vector_store %arg9[%c8_38, %c0_39], %71 {strides = array<i32>} : memref<80x256xbf16, #tpu.memory_space<vmem>>, vector<8x256xbf16>,
    %c15_i32_40 = arith.constant 15 : i32
    %73 = tpu.dynamic_rotate %60 by %c15_i32_40 dim 1 : vector<8x256xf32>, i32 -> vector<8x256xf32>
    %c2_41 = arith.constant 2 : index
    %c0_42 = arith.constant 0 : index
    %74 = vector.load %arg6[%c2_41, %c0_42] : memref<9x256xf32, #tpu.memory_space<vmem>>, vector<1x256xf32>
    %75 = vector.broadcast %74 : vector<1x256xf32> to vector<8x256xf32>
    %76 = arith.mulf %73, %75 : vector<8x256xf32>
    %77 = arith.truncf %76 : vector<8x256xf32> to vector<8x256xbf16>
    %c16_43 = arith.constant 16 : index
    %c0_44 = arith.constant 0 : index
    %78 = vector.load %arg9[%c16_43, %c0_44] : memref<80x256xbf16, #tpu.memory_space<vmem>>, vector<8x256xbf16>
    tpu.vector_store %arg9[%c16_43, %c0_44], %77 {strides = array<i32>} : memref<80x256xbf16, #tpu.memory_space<vmem>>, vector<8x256xbf16>,
    %c1_i32_45 = arith.constant 1 : i32
    %79 = tpu.dynamic_rotate %60 by %c1_i32_45 dim 1 : vector<8x256xf32>, i32 -> vector<8x256xf32>
    %c3_46 = arith.constant 3 : index
    %c0_47 = arith.constant 0 : index
    %80 = vector.load %arg6[%c3_46, %c0_47] : memref<9x256xf32, #tpu.memory_space<vmem>>, vector<1x256xf32>
    %81 = vector.broadcast %80 : vector<1x256xf32> to vector<8x256xf32>
    %82 = arith.mulf %79, %81 : vector<8x256xf32>
    %83 = arith.truncf %82 : vector<8x256xf32> to vector<8x256xbf16>
    %c24_48 = arith.constant 24 : index
    %c0_49 = arith.constant 0 : index
    %84 = vector.load %arg9[%c24_48, %c0_49] : memref<80x256xbf16, #tpu.memory_space<vmem>>, vector<8x256xbf16>
    tpu.vector_store %arg9[%c24_48, %c0_49], %83 {strides = array<i32>} : memref<80x256xbf16, #tpu.memory_space<vmem>>, vector<8x256xbf16>,
    %85 = arith.truncf %60 : vector<8x256xf32> to vector<8x256xbf16>
    %c32_50 = arith.constant 32 : index
    %c0_51 = arith.constant 0 : index
    %86 = vector.load %arg9[%c32_50, %c0_51] : memref<80x256xbf16, #tpu.memory_space<vmem>>, vector<8x256xbf16>
    tpu.vector_store %arg9[%c32_50, %c0_51], %85 {strides = array<i32>} : memref<80x256xbf16, #tpu.memory_space<vmem>>, vector<8x256xbf16>,
    %c255_i32_52 = arith.constant 255 : i32
    %87 = tpu.dynamic_rotate %60 by %c255_i32_52 dim 1 : vector<8x256xf32>, i32 -> vector<8x256xf32>
    %c5_53 = arith.constant 5 : index
    %c0_54 = arith.constant 0 : index
    %88 = vector.load %arg6[%c5_53, %c0_54] : memref<9x256xf32, #tpu.memory_space<vmem>>, vector<1x256xf32>
    %89 = vector.broadcast %88 : vector<1x256xf32> to vector<8x256xf32>
    %90 = arith.mulf %87, %89 : vector<8x256xf32>
    %91 = arith.truncf %90 : vector<8x256xf32> to vector<8x256xbf16>
    %c40 = arith.constant 40 : index
    %c0_55 = arith.constant 0 : index
    %92 = vector.load %arg9[%c40, %c0_55] : memref<80x256xbf16, #tpu.memory_space<vmem>>, vector<8x256xbf16>
    tpu.vector_store %arg9[%c40, %c0_55], %91 {strides = array<i32>} : memref<80x256xbf16, #tpu.memory_space<vmem>>, vector<8x256xbf16>,
    %c241_i32_56 = arith.constant 241 : i32
    %93 = tpu.dynamic_rotate %60 by %c241_i32_56 dim 1 : vector<8x256xf32>, i32 -> vector<8x256xf32>
    %c6_57 = arith.constant 6 : index
    %c0_58 = arith.constant 0 : index
    %94 = vector.load %arg6[%c6_57, %c0_58] : memref<9x256xf32, #tpu.memory_space<vmem>>, vector<1x256xf32>
    %95 = vector.broadcast %94 : vector<1x256xf32> to vector<8x256xf32>
    %96 = arith.mulf %93, %95 : vector<8x256xf32>
    %97 = arith.truncf %96 : vector<8x256xf32> to vector<8x256xbf16>
    %c48 = arith.constant 48 : index
    %c0_59 = arith.constant 0 : index
    %98 = vector.load %arg9[%c48, %c0_59] : memref<80x256xbf16, #tpu.memory_space<vmem>>, vector<8x256xbf16>
    tpu.vector_store %arg9[%c48, %c0_59], %97 {strides = array<i32>} : memref<80x256xbf16, #tpu.memory_space<vmem>>, vector<8x256xbf16>,
    %c240_i32_60 = arith.constant 240 : i32
    %99 = tpu.dynamic_rotate %60 by %c240_i32_60 dim 1 : vector<8x256xf32>, i32 -> vector<8x256xf32>
    %c7_61 = arith.constant 7 : index
    %c0_62 = arith.constant 0 : index
    %100 = vector.load %arg6[%c7_61, %c0_62] : memref<9x256xf32, #tpu.memory_space<vmem>>, vector<1x256xf32>
    %101 = vector.broadcast %100 : vector<1x256xf32> to vector<8x256xf32>
    %102 = arith.mulf %99, %101 : vector<8x256xf32>
    %103 = arith.truncf %102 : vector<8x256xf32> to vector<8x256xbf16>
    %c56 = arith.constant 56 : index
    %c0_63 = arith.constant 0 : index
    %104 = vector.load %arg9[%c56, %c0_63] : memref<80x256xbf16, #tpu.memory_space<vmem>>, vector<8x256xbf16>
    tpu.vector_store %arg9[%c56, %c0_63], %103 {strides = array<i32>} : memref<80x256xbf16, #tpu.memory_space<vmem>>, vector<8x256xbf16>,
    %c239_i32_64 = arith.constant 239 : i32
    %105 = tpu.dynamic_rotate %60 by %c239_i32_64 dim 1 : vector<8x256xf32>, i32 -> vector<8x256xf32>
    %c8_65 = arith.constant 8 : index
    %c0_66 = arith.constant 0 : index
    %106 = vector.load %arg6[%c8_65, %c0_66] : memref<9x256xf32, #tpu.memory_space<vmem>>, vector<1x256xf32>
    %107 = vector.broadcast %106 : vector<1x256xf32> to vector<8x256xf32>
    %108 = arith.mulf %105, %107 : vector<8x256xf32>
    %109 = arith.truncf %108 : vector<8x256xf32> to vector<8x256xbf16>
    %c64 = arith.constant 64 : index
    %c0_67 = arith.constant 0 : index
    %110 = vector.load %arg9[%c64, %c0_67] : memref<80x256xbf16, #tpu.memory_space<vmem>>, vector<8x256xbf16>
    tpu.vector_store %arg9[%c64, %c0_67], %109 {strides = array<i32>} : memref<80x256xbf16, #tpu.memory_space<vmem>>, vector<8x256xbf16>,
    %111 = arith.truncf %0 : vector<4x256xf32> to vector<4x256xbf16>
    %c72 = arith.constant 72 : index
    %c0_68 = arith.constant 0 : index
    %112 = vector.load %arg9[%c72, %c0_68] : memref<80x256xbf16, #tpu.memory_space<vmem>>, vector<4x256xbf16>
    tpu.vector_store %arg9[%c72, %c0_68], %111 {strides = array<i32>} : memref<80x256xbf16, #tpu.memory_space<vmem>>, vector<4x256xbf16>,
    %cst_69 = arith.constant 0.000000e+00 : bf16
    %113 = vector.broadcast %cst_69 : bf16 to vector<4x256xbf16>
    %c76 = arith.constant 76 : index
    %c0_70 = arith.constant 0 : index
    %114 = vector.load %arg9[%c76, %c0_70] : memref<80x256xbf16, #tpu.memory_space<vmem>>, vector<4x256xbf16>
    tpu.vector_store %arg9[%c76, %c0_70], %113 {strides = array<i32>} : memref<80x256xbf16, #tpu.memory_space<vmem>>, vector<4x256xbf16>,
    %c0_71 = arith.constant 0 : index
    %c0_72 = arith.constant 0 : index
    %115 = vector.load %arg4[%c0_71, %c0_72] : memref<8x80xbf16, #tpu.memory_space<vmem>>, vector<8x80xbf16>
    %c0_73 = arith.constant 0 : index
    %c0_74 = arith.constant 0 : index
    %116 = vector.load %arg9[%c0_73, %c0_74] : memref<80x256xbf16, #tpu.memory_space<vmem>>, vector<80x256xbf16>
    %cst_75 = arith.constant dense<0.000000e+00> : vector<8x256xf32>
    %117 = tpu.matmul %115, %116, %cst_75 {dimension_numbers = #tpu.dot_dimension_numbers<[1], [0], [0], [1], [0, 0, 1, 1], [], []>} : vector<8x80xbf16>, vector<80x256xbf16>, vector<8x256xf32> -> vector<8x256xf32>
    %c0_76 = arith.constant 0 : index
    %c0_77 = arith.constant 0 : index
    %118 = vector.load %arg5[%c0_76, %c0_77] : memref<8x1xf32, #tpu.memory_space<vmem>>, vector<8x1xf32>
    %119 = vector.broadcast %118 : vector<8x1xf32> to vector<8x256xf32>
    %120 = arith.addf %117, %119 : vector<8x256xf32>
    %cst_78 = arith.constant 0.000000e+00 : f32
    %121 = vector.broadcast %cst_78 : f32 to vector<8x256xf32>
    %122 = arith.maximumf %120, %121 : vector<8x256xf32>
    %c0_79 = arith.constant 0 : index
    %c0_80 = arith.constant 0 : index
    %123 = vector.load %arg7[%c0_79, %c0_80] : memref<8x256xf32, #tpu.memory_space<vmem>>, vector<8x256xf32>
    tpu.vector_store %arg7[%c0_79, %c0_80], %122 {strides = array<i32>} : memref<8x256xf32, #tpu.memory_space<vmem>>, vector<8x256xf32>,
    return
  }
  func.func @transform_0(%arg0: i32) -> (i32, i32) {
    %c0_i32 = arith.constant 0 : i32
    %c0_i32_0 = arith.constant 0 : i32
    return %c0_i32, %arg0 : i32, i32
  }
  func.func @transform_1(%arg0: i32) -> (i32, i32) {
    %c0_i32 = arith.constant 0 : i32
    %c0_i32_0 = arith.constant 0 : i32
    %c0_i32_1 = arith.constant 0 : i32
    return %c0_i32, %c0_i32_0 : i32, i32
  }
  func.func @transform_2(%arg0: i32) -> (i32, i32) {
    %c0_i32 = arith.constant 0 : i32
    %c0_i32_0 = arith.constant 0 : i32
    %c0_i32_1 = arith.constant 0 : i32
    return %c0_i32, %c0_i32_0 : i32, i32
  }
  func.func @transform_3(%arg0: i32) -> (i32, i32) {
    %c0_i32 = arith.constant 0 : i32
    %c0_i32_0 = arith.constant 0 : i32
    %c0_i32_1 = arith.constant 0 : i32
    return %c0_i32, %c0_i32_0 : i32, i32
  }
  func.func @transform_4(%arg0: i32) -> (i32, i32) {
    %c0_i32 = arith.constant 0 : i32
    %c0_i32_0 = arith.constant 0 : i32
    %c0_i32_1 = arith.constant 0 : i32
    return %c0_i32, %c0_i32_0 : i32, i32
  }
  func.func @transform_5(%arg0: i32) -> (i32, i32) {
    %c0_i32 = arith.constant 0 : i32
    %c0_i32_0 = arith.constant 0 : i32
    %c0_i32_1 = arith.constant 0 : i32
    return %c0_i32, %c0_i32_0 : i32, i32
  }
  func.func @transform_6(%arg0: i32) -> (i32, i32) {
    %c0_i32 = arith.constant 0 : i32
    %c0_i32_0 = arith.constant 0 : i32
    return %c0_i32, %arg0 : i32, i32
  }
}

</mosaic_0001>

<llo_original>
// kernel: basic_block_forward.1
$region0: #{basic_block_forward.1}
  #allocation0 [shape = 'u32[]', space=smem, size = 0x4, offset = 0x4, fixed_abs, tag = 'smem constant byte address 0x4 - core index']
  #allocation1 [shape = 'u32[144,128]{1,0:T(1,128)}', space=vmem, size = 0x12000, scoped, tag = 'internal scratch']
  #allocation2 [shape = 'bf16[48,256]{1,0:T(16,128)(2,1)}', space=vmem, size = 0x6000, scoped, tag = 'scratch operand']
  #allocation3 [shape = 'bf16[80,256]{1,0:T(16,128)(2,1)}', space=vmem, size = 0xa000, scoped, tag = 'scratch operand']
  %s0 = inlined_call_operand.vmem [shape: f32[4,512], index: 0, kind: input, shape index: {}]
  %s1 = inlined_call_operand.vmem [shape: bf16[8,48], index: 1, kind: input, shape index: {}]
  %s2 = inlined_call_operand.vmem [shape: f32[8,1], index: 2, kind: input, shape index: {}]
  %s3 = inlined_call_operand.vmem [shape: bf16[8,80], index: 3, kind: input, shape index: {}]
  %s4 = inlined_call_operand.vmem [shape: f32[8,1], index: 4, kind: input, shape index: {}]
  %s5 = inlined_call_operand.vmem [shape: f32[9,256], index: 5, kind: input, shape index: {}]
  %s6 = inlined_call_operand.vmem [shape: f32[8,512], index: 6, kind: output, shape index: {}]
  %s7 = sld [smem:[#allocation0]]
  $region57: #{basic_block_forward.1} parent=0
    _
  %s9 = ssub.s32 1, %s7
  %s10 = scalar_select 0, %s9, %s7
  loop: start=0, step=1, limit=4
  $region2: #{basic_block_forward.1} parent=0 // loop_pre_header
    _
  $region3: #{basic_block_forward.1} parent=0 // loop_header
    %s12 = sphi 0, %s16
    %p13 = scmp.ge.s32.totalorder %s12, 4
    %s22 = sphi 0, %s24
    %s25 = sphi 0, %s22
    %s26 = sphi 0, %s25
    %s42 = sphi 0, %s26
    %s46 = sphi 0, %s46
    %s48 = sphi 0, %s46
    %s49 = sphi 0, %s48
    %s63 = sphi 0, %s49
    %s67 = sphi 0, %s67
    %s69 = sphi 0, %s67
    %s70 = sphi 0, %s69
    %s84 = sphi 0, %s70
    %s88 = sphi 0, %s88
    %s90 = sphi 0, %s88
    %s91 = sphi 0, %s90
    %s105 = sphi 0, %s91
    %s109 = sphi 0, %s109
    %s111 = sphi 0, %s109
    %s112 = sphi 0, %s111
    %s126 = sphi 0, %s112
    %s130 = sphi 0, %s130
    %s132 = sphi 0, %s130
    %s133 = sphi 0, %s132
    %s147 = sphi 0, %s133
    %s153 = sphi 0, %s155
    %s156 = sphi 0, %s153
    %s157 = sphi 0, %s156
    %s173 = sphi 0, %s157
  $region4: #{basic_block_forward.1} parent=0 // loop_header_branch
    %15 = sbr.rel (%p13) target = $region8
  $region5: #{basic_block_forward.1} parent=0 // loop_body
    %s17 = ssub.s32 %s12, 1
    %s18 = ssub.s32 %s12, 2
    %s19 = sadd.s32 %s12, 1
    %s20 = ssub.s32 %s12, %s19
    %p21 = scmp.eq.s32.totalorder %s20, 0
    %s23 = sadd.s32 %s22, 1
    %s24 = scalar_select %p21, %s22, %s23
    %p27 = pneg %p21
    %p28 = scmp.eq.s32.totalorder %s12, 1
    %p29 = por %p27, %p28
    %p30 = scmp.ne.s32.totalorder %s22, %s25
    %p31 = scmp.eq.s32.totalorder %s12, 0
    %p32 = por %p30, %p31
    %p33 = scmp.ne.s32.totalorder %s22, %s25
    %p34 = scmp.eq.s32.totalorder %s17, 1
    %p35 = por %p33, %p34
    %p36 = scmp.ne.s32.totalorder %s25, %s26
    %p37 = scmp.eq.s32.totalorder %s17, 0
    %p38 = por %p36, %p37
    %p39 = scmp.ne.s32.totalorder %s25, %s26
    %p40 = scmp.eq.s32.totalorder %s18, 1
    %p41 = por %p39, %p40
    %p43 = scmp.ne.s32.totalorder %s26, %s42
    %p44 = scmp.eq.s32.totalorder %s18, 0
    %p45 = por %p43, %p44
    %s47 = sadd.s32 %s46, 1
    %p50 = scmp.eq.s32.totalorder %s12, 1
    %p51 = scmp.ne.s32.totalorder %s46, %s48
    %p52 = scmp.eq.s32.totalorder %s12, 0
    %p53 = por %p51, %p52
    %p54 = scmp.ne.s32.totalorder %s46, %s48
    %p55 = scmp.eq.s32.totalorder %s17, 1
    %p56 = por %p54, %p55
    %p57 = scmp.ne.s32.totalorder %s48, %s49
    %p58 = scmp.eq.s32.totalorder %s17, 0
    %p59 = por %p57, %p58
    %p60 = scmp.ne.s32.totalorder %s48, %s49
    %p61 = scmp.eq.s32.totalorder %s18, 1
    %p62 = por %p60, %p61
    %p64 = scmp.ne.s32.totalorder %s49, %s63
    %p65 = scmp.eq.s32.totalorder %s18, 0
    %p66 = por %p64, %p65
    %s68 = sadd.s32 %s67, 1
    %p71 = scmp.eq.s32.totalorder %s12, 1
    %p72 = scmp.ne.s32.totalorder %s67, %s69
    %p73 = scmp.eq.s32.totalorder %s12, 0
    %p74 = por %p72, %p73
    %p75 = scmp.ne.s32.totalorder %s67, %s69
    %p76 = scmp.eq.s32.totalorder %s17, 1
    %p77 = por %p75, %p76
    %p78 = scmp.ne.s32.totalorder %s69, %s70
    %p79 = scmp.eq.s32.totalorder %s17, 0
    %p80 = por %p78, %p79
    %p81 = scmp.ne.s32.totalorder %s69, %s70
    %p82 = scmp.eq.s32.totalorder %s18, 1
    %p83 = por %p81, %p82
    %p85 = scmp.ne.s32.totalorder %s70, %s84
    %p86 = scmp.eq.s32.totalorder %s18, 0
    %p87 = por %p85, %p86
    %s89 = sadd.s32 %s88, 1
    %p92 = scmp.eq.s32.totalorder %s12, 1
    %p93 = scmp.ne.s32.totalorder %s88, %s90
    %p94 = scmp.eq.s32.totalorder %s12, 0
    %p95 = por %p93, %p94
    %p96 = scmp.ne.s32.totalorder %s88, %s90
    %p97 = scmp.eq.s32.totalorder %s17, 1
    %p98 = por %p96, %p97
    %p99 = scmp.ne.s32.totalorder %s90, %s91
    %p100 = scmp.eq.s32.totalorder %s17, 0
    %p101 = por %p99, %p100
    %p102 = scmp.ne.s32.totalorder %s90, %s91
    %p103 = scmp.eq.s32.totalorder %s18, 1
    %p104 = por %p102, %p103
    %p106 = scmp.ne.s32.totalorder %s91, %s105
    %p107 = scmp.eq.s32.totalorder %s18, 0
    %p108 = por %p106, %p107
    %s110 = sadd.s32 %s109, 1
    %p113 = scmp.eq.s32.totalorder %s12, 1
    %p114 = scmp.ne.s32.totalorder %s109, %s111
    %p115 = scmp.eq.s32.totalorder %s12, 0
    %p116 = por %p114, %p115
    %p117 = scmp.ne.s32.totalorder %s109, %s111
    %p118 = scmp.eq.s32.totalorder %s17, 1
    %p119 = por %p117, %p118
    %p120 = scmp.ne.s32.totalorder %s111, %s112
    %p121 = scmp.eq.s32.totalorder %s17, 0
    %p122 = por %p120, %p121
    %p123 = scmp.ne.s32.totalorder %s111, %s112
    %p124 = scmp.eq.s32.totalorder %s18, 1
    %p125 = por %p123, %p124
    %p127 = scmp.ne.s32.totalorder %s112, %s126
    %p128 = scmp.eq.s32.totalorder %s18, 0
    %p129 = por %p127, %p128
    %s131 = sadd.s32 %s130, 1
    %p134 = scmp.eq.s32.totalorder %s12, 1
    %p135 = scmp.ne.s32.totalorder %s130, %s132
    %p136 = scmp.eq.s32.totalorder %s12, 0
    %p137 = por %p135, %p136
    %p138 = scmp.ne.s32.totalorder %s130, %s132
    %p139 = scmp.eq.s32.totalorder %s17, 1
    %p140 = por %p138, %p139
    %p141 = scmp.ne.s32.totalorder %s132, %s133
    %p142 = scmp.eq.s32.totalorder %s17, 0
    %p143 = por %p141, %p142
    %p144 = scmp.ne.s32.totalorder %s132, %s133
    %p145 = scmp.eq.s32.totalorder %s18, 1
    %p146 = por %p144, %p145
    %p148 = scmp.ne.s32.totalorder %s133, %s147
    %p149 = scmp.eq.s32.totalorder %s18, 0
    %p150 = por %p148, %p149
    %s151 = ssub.s32 %s12, %s19
    %p152 = scmp.eq.s32.totalorder %s151, 0
    %s154 = sadd.s32 %s153, 1
    %s155 = scalar_select %p152, %s153, %s154
    %p158 = pneg %p152
    %p159 = scmp.eq.s32.totalorder %s12, 1
    %p160 = por %p158, %p159
    %p161 = scmp.ne.s32.totalorder %s153, %s156
    %p162 = scmp.eq.s32.totalorder %s12, 0
    %p163 = por %p161, %p162
    %p164 = scmp.ne.s32.totalorder %s153, %s156
    %p165 = scmp.eq.s32.totalorder %s17, 1
    %p166 = por %p164, %p165
    %p167 = scmp.ne.s32.totalorder %s156, %s157
    %p168 = scmp.eq.s32.totalorder %s17, 0
    %p169 = por %p167, %p168
    %p170 = scmp.ne.s32.totalorder %s156, %s157
    %p171 = scmp.eq.s32.totalorder %s18, 1
    %p172 = por %p170, %p171
    %p174 = scmp.ne.s32.totalorder %s157, %s173
    %p175 = scmp.eq.s32.totalorder %s18, 0
    %p176 = por %p174, %p175
    %p177 = scmp.le.s32.totalorder 1, %s12
    %p178 = scmp.lt.s32.totalorder %s12, 3
    %p179 = pnand %p177, %p178
    %p180 = pneg %p179
    // Predicated region
    $region9: #{basic_block_forward.1} parent=5 // pred_check
      _
    $region10: #{basic_block_forward.1} parent=5 // pred_check_branch
      %182 = sbr.rel (%p179) target = $region12
    $region11: #{basic_block_forward.1} parent=5 // pred_region
      %s183 = ssub.s32 %s12, 1
      // Predicated region
      $region13: #{basic_block_forward.1} parent=11 // pred_check
        %p184 = pneg %p59
      $region14: #{basic_block_forward.1} parent=11 // pred_check_branch
        %186 = sbr.rel (%p184) target = $region16
      $region15: #{basic_block_forward.1} parent=11 // pred_region
        _
      $region16: #{basic_block_forward.1} parent=11 // pred_fallthru
        _
      // Predicated region
      $region17: #{basic_block_forward.1} parent=11 // pred_check
        %p187 = pneg %p80
      $region18: #{basic_block_forward.1} parent=11 // pred_check_branch
        %189 = sbr.rel (%p187) target = $region20
      $region19: #{basic_block_forward.1} parent=11 // pred_region
        _
      $region20: #{basic_block_forward.1} parent=11 // pred_fallthru
        _
      // Predicated region
      $region21: #{basic_block_forward.1} parent=11 // pred_check
        %p190 = pneg %p101
      $region22: #{basic_block_forward.1} parent=11 // pred_check_branch
        %192 = sbr.rel (%p190) target = $region24
      $region23: #{basic_block_forward.1} parent=11 // pred_region
        _
      $region24: #{basic_block_forward.1} parent=11 // pred_fallthru
        _
      // Predicated region
      $region25: #{basic_block_forward.1} parent=11 // pred_check
        %p193 = pneg %p122
      $region26: #{basic_block_forward.1} parent=11 // pred_check_branch
        %195 = sbr.rel (%p193) target = $region28
      $region27: #{basic_block_forward.1} parent=11 // pred_region
        _
      $region28: #{basic_block_forward.1} parent=11 // pred_fallthru
        _
      // Predicated region
      $region29: #{basic_block_forward.1} parent=11 // pred_check
        %p196 = pneg %p143
      $region30: #{basic_block_forward.1} parent=11 // pred_check_branch
        %198 = sbr.rel (%p196) target = $region32
      $region31: #{basic_block_forward.1} parent=11 // pred_region
        _
      $region32: #{basic_block_forward.1} parent=11 // pred_fallthru
        _
    $region12: #{basic_block_forward.1} parent=5 // pred_fallthru
      _
    %p199 = scmp.lt.s32.totalorder %s12, 2
    // Predicated region
    $region33: #{basic_block_forward.1} parent=5 // pred_check
      %p200 = pneg %p199
    $region34: #{basic_block_forward.1} parent=5 // pred_check_branch
      %202 = sbr.rel (%p200) target = $region36
    $region35: #{basic_block_forward.1} parent=5 // pred_region
      // Predicated region
      $region37: #{basic_block_forward.1} parent=35 // pred_check
        %p203 = pneg %p32
      $region38: #{basic_block_forward.1} parent=35 // pred_check_branch
        %205 = sbr.rel (%p203) target = $region40
      $region39: #{basic_block_forward.1} parent=35 // pred_region
        %s206 = smul.u32 2, %s12
        %p207 = scmp.lt.s32.totalorder %s206, 3
        %s208 = scalar_select %p207, %s206, 3
        %s209 = smul.addr %s208, 4
        %s210 = scalar_lea.vmem %s0, %s209
        %s211 = smul.u32 2, %s12
      $region40: #{basic_block_forward.1} parent=35 // pred_fallthru
        _
    $region36: #{basic_block_forward.1} parent=5 // pred_fallthru
      _
    %p212 = scmp.le.s32.totalorder 1, %s12
    %p213 = scmp.lt.s32.totalorder %s12, 3
    %p214 = pnand %p212, %p213
    %p215 = pneg %p214
    // Predicated region
    $region41: #{basic_block_forward.1} parent=5 // pred_check
      _
    $region42: #{basic_block_forward.1} parent=5 // pred_check_branch
      %217 = sbr.rel (%p214) target = $region44
    $region43: #{basic_block_forward.1} parent=5 // pred_region
      %s218 = ssub.s32 %s12, 1
      %s219 = smul.u32 2, %s17
      %p220 = scmp.lt.s32.totalorder %s219, 3
      %s221 = scalar_select %p220, %s219, 3
      %s222 = smul.addr %s221, 4
      %s223 = scalar_lea.vmem %s0, %s222
      %p224 = pneg %p38
      %p225 = pneg %p35
      %p226 = pneg %p59
      %p227 = pneg %p56
      %p228 = pneg %p80
      %p229 = pneg %p77
      %p230 = pneg %p101
      %p231 = pneg %p98
      %p232 = pneg %p122
      %p233 = pneg %p119
      %p234 = pneg %p143
      %p235 = pneg %p140
      %p236 = pneg %p169
      %p237 = pneg %p166
      %s238 = smul.u32 2, %s17
      %p239 = scmp.lt.s32.totalorder %s238, 3
      %s240 = scalar_select %p239, %s238, 3
      %s241 = smul.addr %s240, 8
      %s242 = scalar_lea.vmem %s6, %s241
      %s243 = smul.u32 2, %s17
      %p244 = scmp.lt.s32.totalorder %s243, 3
      %s245 = scalar_select %p244, %s243, 3
      %s246 = smul.addr %s245, 4
      %s247 = scalar_lea.vmem %s0, %s246
      %s248 = smul.u32 2, %s17
      %s249 = smul.u32 2, %s17
      %p250 = scmp.lt.s32.totalorder %s249, 3
      %s251 = scalar_select %p250, %s249, 3
      %s252 = smul.addr %s251, 8
      %s253 = scalar_lea.vmem %s6, %s252
      %s254 = smul.u32 2, %s17
      %v256 = vld [vmem:[%s247] sm:$0xff]
      %v258 = vcombine.high %v256, %v256
      %260 = vrot.lane.b32.xlu0 %v256, 17
      %v261 = vpop.permute.xlu0 %260
      %262 = vrot.lane.b32.xlu0 %v258, 17
      %v263 = vpop.permute.xlu0 %262
      %v264 = vlaneseq
      %v265 = vand.u32 %v264, 127
      %vm266 = vcmp.lt.s32.totalorder %v265, 17
      %v267 = vsel %vm266, %v261, %v263
      %v268 = vsel %vm266, %v263, %v261
      %v269 = vld [vmem:[%s5] ss:$8 sm:$0x3]
      %v271 = vlaneseq
      %v272 = vshrl.u32 %v271, 7
      %v273 = vsub.s32 0, %v272
      %v274 = vrot.slane %v269, %v273
      %v275 = vlaneseq
      %v276 = vshrl.u32 %v275, 7
      %v277 = vsub.s32 1, %v276
      %v278 = vrot.slane %v269, %v277
      %v281 = vmul.f32 %v268, %v274
      %v282 = vmul.f32 %v267, %v278
      %v283 = vpack.c.bf16 %v281, %v281
      %v284 = vpack.c.bf16 %v282, %v282
      %285 = vst [vmem:[#allocation2] sm:$0x3] %v283
      %286 = vst [vmem:[#allocation2 + $0x8] sm:$0x3] %v284
      %287 = vrot.lane.b32.xlu0 %v256, 16
      %v288 = vpop.permute.xlu0 %287
      %289 = vrot.lane.b32.xlu0 %v258, 16
      %v290 = vpop.permute.xlu0 %289
      %vm291 = vcmp.lt.s32.totalorder %v265, 16
      %v292 = vsel %vm291, %v288, %v290
      %v293 = vsel %vm291, %v290, %v288
      %s294 = scalar_lea.vmem %s5, 1
      %v295 = vld [vmem:[%s294] ss:$8 sm:$0x3]
      %v297 = vlaneseq
      %v298 = vshrl.u32 %v297, 7
      %v299 = vsub.s32 0, %v298
      %v300 = vrot.slane %v295, %v299
      %v301 = vlaneseq
      %v302 = vshrl.u32 %v301, 7
      %v303 = vsub.s32 1, %v302
      %v304 = vrot.slane %v295, %v303
      %v307 = vmul.f32 %v293, %v300
      %v308 = vmul.f32 %v292, %v304
      %v309 = vpack.c.bf16 %v307, %v307
      %v310 = vpack.c.bf16 %v308, %v308
      %v313 = vrot.slane %v309, 6
      %v314 = vrot.slane %v310, 6
      %317 = vst [vmem:[#allocation2] sm:$0xc] %v313
      %318 = vst [vmem:[#allocation2 + $0x8] sm:$0xc] %v314
      %319 = vrot.lane.b32.xlu0 %v256, 15
      %v320 = vpop.permute.xlu0 %319
      %321 = vrot.lane.b32.xlu0 %v258, 15
      %v322 = vpop.permute.xlu0 %321
      %vm323 = vcmp.lt.s32.totalorder %v265, 15
      %v324 = vsel %vm323, %v320, %v322
      %v325 = vsel %vm323, %v322, %v320
      %s326 = scalar_lea.vmem %s5, 2
      %v327 = vld [vmem:[%s326] ss:$8 sm:$0x3]
      %v329 = vlaneseq
      %v330 = vshrl.u32 %v329, 7
      %v331 = vsub.s32 0, %v330
      %v332 = vrot.slane %v327, %v331
      %v333 = vlaneseq
      %v334 = vshrl.u32 %v333, 7
      %v335 = vsub.s32 1, %v334
      %v336 = vrot.slane %v327, %v335
      %v339 = vmul.f32 %v325, %v332
      %v340 = vmul.f32 %v324, %v336
      %v341 = vpack.c.bf16 %v339, %v339
      %v342 = vpack.c.bf16 %v340, %v340
      %v345 = vrot.slane %v341, 4
      %v346 = vrot.slane %v342, 4
      %349 = vst [vmem:[#allocation2] sm:$0x30] %v345
      %350 = vst [vmem:[#allocation2 + $0x8] sm:$0x30] %v346
      %351 = vrot.lane.b32.xlu0 %v256, 1
      %v352 = vpop.permute.xlu0 %351
      %353 = vrot.lane.b32.xlu0 %v258, 1
      %v354 = vpop.permute.xlu0 %353
      %vm355 = vcmp.lt.s32.totalorder %v265, 1
      %v356 = vsel %vm355, %v352, %v354
      %v357 = vsel %vm355, %v354, %v352
      %s358 = scalar_lea.vmem %s5, 3
      %v359 = vld [vmem:[%s358] ss:$8 sm:$0x3]
      %v361 = vlaneseq
      %v362 = vshrl.u32 %v361, 7
      %v363 = vsub.s32 0, %v362
      %v364 = vrot.slane %v359, %v363
      %v365 = vlaneseq
      %v366 = vshrl.u32 %v365, 7
      %v367 = vsub.s32 1, %v366
      %v368 = vrot.slane %v359, %v367
      %v371 = vmul.f32 %v357, %v364
      %v372 = vmul.f32 %v356, %v368
      %v373 = vpack.c.bf16 %v371, %v371
      %v374 = vpack.c.bf16 %v372, %v372
      %v377 = vrot.slane %v373, 2
      %v378 = vrot.slane %v374, 2
      %381 = vst [vmem:[#allocation2] sm:$0xc0] %v377
      %382 = vst [vmem:[#allocation2 + $0x8] sm:$0xc0] %v378
      %v383 = vpack.c.bf16 %v256, %v256
      %v384 = vpack.c.bf16 %v258, %v258
      %385 = vst [vmem:[#allocation2 + $0x10] sm:$0x3] %v383
      %386 = vst [vmem:[#allocation2 + $0x18] sm:$0x3] %v384
      %387 = vrot.lane.b32.xlu0 %v256, 127
      %v388 = vpop.permute.xlu0 %387
      %389 = vrot.lane.b32.xlu0 %v258, 127
      %v390 = vpop.permute.xlu0 %389
      %vm391 = vcmp.lt.s32.totalorder %v265, 127
      %v392 = vsel %vm391, %v388, %v390
      %v393 = vsel %vm391, %v390, %v388
      %s394 = scalar_lea.vmem %s5, 5
      %v395 = vld [vmem:[%s394] ss:$8 sm:$0x3]
      %v397 = vlaneseq
      %v398 = vshrl.u32 %v397, 7
      %v399 = vsub.s32 0, %v398
      %v400 = vrot.slane %v395, %v399
      %v401 = vlaneseq
      %v402 = vshrl.u32 %v401, 7
      %v403 = vsub.s32 1, %v402
      %v404 = vrot.slane %v395, %v403
      %v407 = vmul.f32 %v392, %v400
      %v408 = vmul.f32 %v393, %v404
      %v409 = vpack.c.bf16 %v407, %v407
      %v410 = vpack.c.bf16 %v408, %v408
      %v413 = vrot.slane %v409, 6
      %v414 = vrot.slane %v410, 6
      %417 = vst [vmem:[#allocation2 + $0x10] sm:$0xc] %v413
      %418 = vst [vmem:[#allocation2 + $0x18] sm:$0xc] %v414
      %419 = vrot.lane.b32.xlu0 %v256, 113
      %v420 = vpop.permute.xlu0 %419
      %421 = vrot.lane.b32.xlu0 %v258, 113
      %v422 = vpop.permute.xlu0 %421
      %vm423 = vcmp.lt.s32.totalorder %v265, 113
      %v424 = vsel %vm423, %v420, %v422
      %v425 = vsel %vm423, %v422, %v420
      %s426 = scalar_lea.vmem %s5, 6
      %v427 = vld [vmem:[%s426] ss:$8 sm:$0x3]
      %v429 = vlaneseq
      %v430 = vshrl.u32 %v429, 7
      %v431 = vsub.s32 0, %v430
      %v432 = vrot.slane %v427, %v431
      %v433 = vlaneseq
      %v434 = vshrl.u32 %v433, 7
      %v435 = vsub.s32 1, %v434
      %v436 = vrot.slane %v427, %v435
      %v439 = vmul.f32 %v424, %v432
      %v440 = vmul.f32 %v425, %v436
      %v441 = vpack.c.bf16 %v439, %v439
      %v442 = vpack.c.bf16 %v440, %v440
      %v445 = vrot.slane %v441, 4
      %v446 = vrot.slane %v442, 4
      %449 = vst [vmem:[#allocation2 + $0x10] sm:$0x30] %v445
      %450 = vst [vmem:[#allocation2 + $0x18] sm:$0x30] %v446
      %451 = vrot.lane.b32.xlu0 %v256, 112
      %v452 = vpop.permute.xlu0 %451
      %453 = vrot.lane.b32.xlu0 %v258, 112
      %v454 = vpop.permute.xlu0 %453
      %vm455 = vcmp.lt.s32.totalorder %v265, 112
      %v456 = vsel %vm455, %v452, %v454
      %v457 = vsel %vm455, %v454, %v452
      %s458 = scalar_lea.vmem %s5, 7
      %v459 = vld [vmem:[%s458] ss:$8 sm:$0x3]
      %v461 = vlaneseq
      %v462 = vshrl.u32 %v461, 7
      %v463 = vsub.s32 0, %v462
      %v464 = vrot.slane %v459, %v463
      %v465 = vlaneseq
      %v466 = vshrl.u32 %v465, 7
      %v467 = vsub.s32 1, %v466
      %v468 = vrot.slane %v459, %v467
      %v471 = vmul.f32 %v456, %v464
      %v472 = vmul.f32 %v457, %v468
      %v473 = vpack.c.bf16 %v471, %v471
      %v474 = vpack.c.bf16 %v472, %v472
      %v477 = vrot.slane %v473, 2
      %v478 = vrot.slane %v474, 2
      %481 = vst [vmem:[#allocation2 + $0x10] sm:$0xc0] %v477
      %482 = vst [vmem:[#allocation2 + $0x18] sm:$0xc0] %v478
      %483 = vrot.lane.b32.xlu0 %v256, 111
      %v484 = vpop.permute.xlu0 %483
      %485 = vrot.lane.b32.xlu0 %v258, 111
      %v486 = vpop.permute.xlu0 %485
      %vm487 = vcmp.lt.s32.totalorder %v265, 111
      %v488 = vsel %vm487, %v484, %v486
      %v489 = vsel %vm487, %v486, %v484
      %s490 = scalar_lea.vmem %s5, 16
      %v491 = vld [vmem:[%s490] ss:$8 sm:$0x3]
      %v493 = vlaneseq
      %v494 = vshrl.u32 %v493, 7
      %v495 = vsub.s32 0, %v494
      %v496 = vrot.slane %v491, %v495
      %v497 = vlaneseq
      %v498 = vshrl.u32 %v497, 7
      %v499 = vsub.s32 1, %v498
      %v500 = vrot.slane %v491, %v499
      %v503 = vmul.f32 %v488, %v496
      %v504 = vmul.f32 %v489, %v500
      %v505 = vpack.c.bf16 %v503, %v503
      %v506 = vpack.c.bf16 %v504, %v504
      %507 = vst [vmem:[#allocation2 + $0x20] sm:$0x3] %v505
      %508 = vst [vmem:[#allocation2 + $0x28] sm:$0x3] %v506
      %509 = vst [vmem:[#allocation2 + $0x20] sm:$0xfc] 0
      %510 = vst [vmem:[#allocation2 + $0x28] sm:$0xfc] 0
      %v511 = vld [vmem:[%s1] sm:$0xf]
      %v512 = vld [vmem:[#allocation2] sm:$0xff]
      %v513 = vld [vmem:[#allocation2 + $0x8] sm:$0xff]
      %v514 = vld [vmem:[#allocation2 + $0x10] sm:$0xff]
      %v515 = vld [vmem:[#allocation2 + $0x18] sm:$0xff]
      %v516 = vld [vmem:[#allocation2 + $0x20] sm:$0xff]
      %v517 = vld [vmem:[#allocation2 + $0x28] sm:$0xff]
      %v518 = vld [vmem:[%s2] sm:$0xff]
      %520 = vset.pattern.permute.xlu0 0
      %521 = vperm.xlu0 %520, %v518
      %v522 = vpop.permute.xlu0 %521
      %vm524 = vcmask 392192
      %v526 = vsel %vm524, %v511, 0
      %528 = vmatprep.subr.bf16.mxu0 %v513
      %529 = vmatpush1.bf16.msra.mxu0 %v512
      %530 = vmatprep.subr.bf16.mxu0 %v515
      %531 = vmatpush1.bf16.msra.mxu0 %v514
      %532 = vmatprep.subr.bf16.mxu0 %v517
      %533 = vmatpush1.bf16.msra.mxu0 %v516
      %534 = vmatprep.subr.bf16.mxu0 0
      %535 = vmatpush1.bf16.msra.mxu0 0
      %536 = vmatprep.subr.bf16.mxu0 0
      %537 = vmatpush1.bf16.msra.mxu0 0
      %538 = vmatprep.subr.bf16.mxu0 0
      %539 = vmatpush1.bf16.msra.mxu0 0
      %540 = vmatprep.subr.bf16.mxu0 0
      %541 = vmatpush1.bf16.msra.mxu0 0
      %542 = vmatprep.subr.bf16.mxu0 0
      %543 = vmatpush1.bf16.msra.mxu0 0
      %544 = vmatprep.subr.bf16.mxu0 0
      %545 = vmatpush1.bf16.msra.mxu0 0
      %546 = vmatprep.subr.bf16.mxu0 0
      %547 = vmatpush1.bf16.msra.mxu0 0
      %548 = vmatprep.subr.bf16.mxu0 0
      %549 = vmatpush1.bf16.msra.mxu0 0
      %550 = vmatprep.subr.bf16.mxu0 0
      %551 = vmatpush1.bf16.msra.mxu0 0
      %552 = vmatprep.subr.bf16.mxu0 0
      %553 = vmatpush1.bf16.msra.mxu0 0
      %554 = vmatprep.subr.bf16.mxu0 0
      %555 = vmatpush1.bf16.msra.mxu0 0
      %556 = vmatprep.subr.bf16.mxu0 0
      %557 = vmatpush1.bf16.msra.mxu0 0
      %558 = vmatprep.subr.bf16.mxu0 0
      %559 = vmatpush1.bf16.msra.mxu0 0
      %560 = vmatprep.mubr.bf16.mxu0 0
      %561 = vmatmul.mubr.bf16.gmra.mrb[0].mxu0 %v526
      %v562 = vpop.f32.mrb[0].mxu0
      %v563 = vadd.f32 %v522, %v562
      %v564 = vpop.f32.mrb[0].mxu0
      %v565 = vadd.f32 %v522, %v564
      %v566 = vpop.f32.mrb[0].mxu0
      %v567 = vpop.f32.mrb[0].mxu0
      %568 = vdwg.mxu0
      %v569 = vmax.f32 %v563, 0.0
      %v570 = vmax.f32 %v565, 0.0
      %571 = vrot.lane.b32.xlu0 %v569, 17
      %v572 = vpop.permute.xlu0 %571
      %573 = vrot.lane.b32.xlu0 %v570, 17
      %v574 = vpop.permute.xlu0 %573
      %v575 = vsel %vm266, %v572, %v574
      %v576 = vsel %vm266, %v574, %v572
      %v577 = vld [vmem:[%s5] ss:$8 sm:$0x3]
      %v579 = vlaneseq
      %v580 = vshrl.u32 %v579, 7
      %v581 = vsub.s32 0, %v580
      %v582 = vrot.slane %v577, %v581
      %v583 = vlaneseq
      %v584 = vshrl.u32 %v583, 7
      %v585 = vsub.s32 1, %v584
      %v586 = vrot.slane %v577, %v585
      %v589 = vmul.f32 %v576, %v582
      %v590 = vmul.f32 %v575, %v586
      %v591 = vpack.c.bf16 %v589, %v589
      %v592 = vpack.c.bf16 %v590, %v590
      %593 = vst [vmem:[#allocation3] sm:$0xf] %v591
      %594 = vst [vmem:[#allocation3 + $0x8] sm:$0xf] %v592
      %595 = vrot.lane.b32.xlu0 %v569, 16
      %v596 = vpop.permute.xlu0 %595
      %597 = vrot.lane.b32.xlu0 %v570, 16
      %v598 = vpop.permute.xlu0 %597
      %v599 = vsel %vm291, %v596, %v598
      %v600 = vsel %vm291, %v598, %v596
      %v601 = vld [vmem:[%s294] ss:$8 sm:$0x3]
      %v603 = vlaneseq
      %v604 = vshrl.u32 %v603, 7
      %v605 = vsub.s32 0, %v604
      %v606 = vrot.slane %v601, %v605
      %v607 = vlaneseq
      %v608 = vshrl.u32 %v607, 7
      %v609 = vsub.s32 1, %v608
      %v610 = vrot.slane %v601, %v609
      %v613 = vmul.f32 %v600, %v606
      %v614 = vmul.f32 %v599, %v610
      %v615 = vpack.c.bf16 %v613, %v613
      %v616 = vpack.c.bf16 %v614, %v614
      %v619 = vrot.slane %v615, 4
      %v620 = vrot.slane %v616, 4
      %623 = vst [vmem:[#allocation3] sm:$0xf0] %v619
      %624 = vst [vmem:[#allocation3 + $0x8] sm:$0xf0] %v620
      %625 = vrot.lane.b32.xlu0 %v569, 15
      %v626 = vpop.permute.xlu0 %625
      %627 = vrot.lane.b32.xlu0 %v570, 15
      %v628 = vpop.permute.xlu0 %627
      %v629 = vsel %vm323, %v626, %v628
      %v630 = vsel %vm323, %v628, %v626
      %v631 = vld [vmem:[%s326] ss:$8 sm:$0x3]
      %v633 = vlaneseq
      %v634 = vshrl.u32 %v633, 7
      %v635 = vsub.s32 0, %v634
      %v636 = vrot.slane %v631, %v635
      %v637 = vlaneseq
      %v638 = vshrl.u32 %v637, 7
      %v639 = vsub.s32 1, %v638
      %v640 = vrot.slane %v631, %v639
      %v643 = vmul.f32 %v630, %v636
      %v644 = vmul.f32 %v629, %v640
      %v645 = vpack.c.bf16 %v643, %v643
      %v646 = vpack.c.bf16 %v644, %v644
      %647 = vst [vmem:[#allocation3 + $0x10] sm:$0xf] %v645
      %648 = vst [vmem:[#allocation3 + $0x18] sm:$0xf] %v646
      %649 = vrot.lane.b32.xlu0 %v569, 1
      %v650 = vpop.permute.xlu0 %649
      %651 = vrot.lane.b32.xlu0 %v570, 1
      %v652 = vpop.permute.xlu0 %651
      %v653 = vsel %vm355, %v650, %v652
      %v654 = vsel %vm355, %v652, %v650
      %v655 = vld [vmem:[%s358] ss:$8 sm:$0x3]
      %v657 = vlaneseq
      %v658 = vshrl.u32 %v657, 7
      %v659 = vsub.s32 0, %v658
      %v660 = vrot.slane %v655, %v659
      %v661 = vlaneseq
      %v662 = vshrl.u32 %v661, 7
      %v663 = vsub.s32 1, %v662
      %v664 = vrot.slane %v655, %v663
      %v667 = vmul.f32 %v654, %v660
      %v668 = vmul.f32 %v653, %v664
      %v669 = vpack.c.bf16 %v667, %v667
      %v670 = vpack.c.bf16 %v668, %v668
      %v673 = vrot.slane %v669, 4
      %v674 = vrot.slane %v670, 4
      %677 = vst [vmem:[#allocation3 + $0x10] sm:$0xf0] %v673
      %678 = vst [vmem:[#allocation3 + $0x18] sm:$0xf0] %v674
      %v679 = vpack.c.bf16 %v569, %v569
      %v680 = vpack.c.bf16 %v570, %v570
      %681 = vst [vmem:[#allocation3 + $0x20] sm:$0xf] %v679
      %682 = vst [vmem:[#allocation3 + $0x28] sm:$0xf] %v680
      %683 = vrot.lane.b32.xlu0 %v569, 127
      %v684 = vpop.permute.xlu0 %683
      %685 = vrot.lane.b32.xlu0 %v570, 127
      %v686 = vpop.permute.xlu0 %685
      %v687 = vsel %vm391, %v684, %v686
      %v688 = vsel %vm391, %v686, %v684
      %v689 = vld [vmem:[%s394] ss:$8 sm:$0x3]
      %v691 = vlaneseq
      %v692 = vshrl.u32 %v691, 7
      %v693 = vsub.s32 0, %v692
      %v694 = vrot.slane %v689, %v693
      %v695 = vlaneseq
      %v696 = vshrl.u32 %v695, 7
      %v697 = vsub.s32 1, %v696
      %v698 = vrot.slane %v689, %v697
      %v701 = vmul.f32 %v687, %v694
      %v702 = vmul.f32 %v688, %v698
      %v703 = vpack.c.bf16 %v701, %v701
      %v704 = vpack.c.bf16 %v702, %v702
      %v707 = vrot.slane %v703, 4
      %v708 = vrot.slane %v704, 4
      %711 = vst [vmem:[#allocation3 + $0x20] sm:$0xf0] %v707
      %712 = vst [vmem:[#allocation3 + $0x28] sm:$0xf0] %v708
      %713 = vrot.lane.b32.xlu0 %v569, 113
      %v714 = vpop.permute.xlu0 %713
      %715 = vrot.lane.b32.xlu0 %v570, 113
      %v716 = vpop.permute.xlu0 %715
      %v717 = vsel %vm423, %v714, %v716
      %v718 = vsel %vm423, %v716, %v714
      %v719 = vld [vmem:[%s426] ss:$8 sm:$0x3]
      %v721 = vlaneseq
      %v722 = vshrl.u32 %v721, 7
      %v723 = vsub.s32 0, %v722
      %v724 = vrot.slane %v719, %v723
      %v725 = vlaneseq
      %v726 = vshrl.u32 %v725, 7
      %v727 = vsub.s32 1, %v726
      %v728 = vrot.slane %v719, %v727
      %v731 = vmul.f32 %v717, %v724
      %v732 = vmul.f32 %v718, %v728
      %v733 = vpack.c.bf16 %v731, %v731
      %v734 = vpack.c.bf16 %v732, %v732
      %735 = vst [vmem:[#allocation3 + $0x30] sm:$0xf] %v733
      %736 = vst [vmem:[#allocation3 + $0x38] sm:$0xf] %v734
      %737 = vrot.lane.b32.xlu0 %v569, 112
      %v738 = vpop.permute.xlu0 %737
      %739 = vrot.lane.b32.xlu0 %v570, 112
      %v740 = vpop.permute.xlu0 %739
      %v741 = vsel %vm455, %v738, %v740
      %v742 = vsel %vm455, %v740, %v738
      %v743 = vld [vmem:[%s458] ss:$8 sm:$0x3]
      %v745 = vlaneseq
      %v746 = vshrl.u32 %v745, 7
      %v747 = vsub.s32 0, %v746
      %v748 = vrot.slane %v743, %v747
      %v749 = vlaneseq
      %v750 = vshrl.u32 %v749, 7
      %v751 = vsub.s32 1, %v750
      %v752 = vrot.slane %v743, %v751
      %v755 = vmul.f32 %v741, %v748
      %v756 = vmul.f32 %v742, %v752
      %v757 = vpack.c.bf16 %v755, %v755
      %v758 = vpack.c.bf16 %v756, %v756
      %v761 = vrot.slane %v757, 4
      %v762 = vrot.slane %v758, 4
      %765 = vst [vmem:[#allocation3 + $0x30] sm:$0xf0] %v761
      %766 = vst [vmem:[#allocation3 + $0x38] sm:$0xf0] %v762
      %767 = vrot.lane.b32.xlu0 %v569, 111
      %v768 = vpop.permute.xlu0 %767
      %769 = vrot.lane.b32.xlu0 %v570, 111
      %v770 = vpop.permute.xlu0 %769
      %v771 = vsel %vm487, %v768, %v770
      %v772 = vsel %vm487, %v770, %v768
      %v773 = vld [vmem:[%s490] ss:$8 sm:$0x3]
      %v775 = vlaneseq
      %v776 = vshrl.u32 %v775, 7
      %v777 = vsub.s32 0, %v776
      %v778 = vrot.slane %v773, %v777
      %v779 = vlaneseq
      %v780 = vshrl.u32 %v779, 7
      %v781 = vsub.s32 1, %v780
      %v782 = vrot.slane %v773, %v781
      %v785 = vmul.f32 %v771, %v778
      %v786 = vmul.f32 %v772, %v782
      %v787 = vpack.c.bf16 %v785, %v785
      %v788 = vpack.c.bf16 %v786, %v786
      %789 = vst [vmem:[#allocation3 + $0x40] sm:$0xf] %v787
      %790 = vst [vmem:[#allocation3 + $0x48] sm:$0xf] %v788
      %v793 = vrot.slane %v383, 4
      %v794 = vrot.slane %v384, 4
      %797 = vst [vmem:[#allocation3 + $0x40] sm:$0x30] %v793
      %798 = vst [vmem:[#allocation3 + $0x48] sm:$0x30] %v794
      %799 = vst [vmem:[#allocation3 + $0x40] sm:$0xc0] 0
      %800 = vst [vmem:[#allocation3 + $0x48] sm:$0xc0] 0
      %v801 = vld [vmem:[%s3] sm:$0xf]
      %v802 = vld [vmem:[#allocation3] sm:$0xff]
      %v803 = vld [vmem:[#allocation3 + $0x8] sm:$0xff]
      %v804 = vld [vmem:[#allocation3 + $0x10] sm:$0xff]
      %v805 = vld [vmem:[#allocation3 + $0x18] sm:$0xff]
      %v806 = vld [vmem:[#allocation3 + $0x20] sm:$0xff]
      %v807 = vld [vmem:[#allocation3 + $0x28] sm:$0xff]
      %v808 = vld [vmem:[#allocation3 + $0x30] sm:$0xff]
      %v809 = vld [vmem:[#allocation3 + $0x38] sm:$0xff]
      %v810 = vld [vmem:[#allocation3 + $0x40] sm:$0xff]
      %v811 = vld [vmem:[#allocation3 + $0x48] sm:$0xff]
      %v812 = vld [vmem:[%s4] sm:$0xff]
      %814 = vset.pattern.permute.xlu0 0
      %815 = vperm.xlu0 %814, %v812
      %v816 = vpop.permute.xlu0 %815
      %vm818 = vcmask 654336
      %v820 = vsel %vm818, %v801, 0
      %822 = vmatprep.subr.bf16.mxu0 %v803
      %823 = vmatpush1.bf16.msra.mxu0 %v802
      %824 = vmatprep.subr.bf16.mxu0 %v805
      %825 = vmatpush1.bf16.msra.mxu0 %v804
      %826 = vmatprep.subr.bf16.mxu0 %v807
      %827 = vmatpush1.bf16.msra.mxu0 %v806
      %828 = vmatprep.subr.bf16.mxu0 %v809
      %829 = vmatpush1.bf16.msra.mxu0 %v808
      %830 = vmatprep.subr.bf16.mxu0 %v811
      %831 = vmatpush1.bf16.msra.mxu0 %v810
      %832 = vmatprep.subr.bf16.mxu0 0
      %833 = vmatpush1.bf16.msra.mxu0 0
      %834 = vmatprep.subr.bf16.mxu0 0
      %835 = vmatpush1.bf16.msra.mxu0 0
      %836 = vmatprep.subr.bf16.mxu0 0
      %837 = vmatpush1.bf16.msra.mxu0 0
      %838 = vmatprep.subr.bf16.mxu0 0
      %839 = vmatpush1.bf16.msra.mxu0 0
      %840 = vmatprep.subr.bf16.mxu0 0
      %841 = vmatpush1.bf16.msra.mxu0 0
      %842 = vmatprep.subr.bf16.mxu0 0
      %843 = vmatpush1.bf16.msra.mxu0 0
      %844 = vmatprep.subr.bf16.mxu0 0
      %845 = vmatpush1.bf16.msra.mxu0 0
      %846 = vmatprep.subr.bf16.mxu0 0
      %847 = vmatpush1.bf16.msra.mxu0 0
      %848 = vmatprep.subr.bf16.mxu0 0
      %849 = vmatpush1.bf16.msra.mxu0 0
      %850 = vmatprep.subr.bf16.mxu0 0
      %851 = vmatpush1.bf16.msra.mxu0 0
      %852 = vmatprep.subr.bf16.mxu0 0
      %853 = vmatpush1.bf16.msra.mxu0 0
      %854 = vmatprep.mubr.bf16.mxu0 0
      %855 = vmatmul.mubr.bf16.gmra.mrb[0].mxu0 %v820
      %v856 = vpop.f32.mrb[0].mxu0
      %v857 = vadd.f32 %v816, %v856
      %v858 = vpop.f32.mrb[0].mxu0
      %v859 = vadd.f32 %v816, %v858
      %v860 = vpop.f32.mrb[0].mxu0
      %v861 = vpop.f32.mrb[0].mxu0
      %862 = vdwg.mxu0
      %v863 = vmax.f32 %v857, 0.0
      %v864 = vmax.f32 %v859, 0.0
      %865 = vst [vmem:[%s253] sm:$0xff] %v863
      %866 = vst [vmem:[%s253 + $0x8] sm:$0xff] %v864
      %s867 = smul.u32 2, %s17
      %p868 = scmp.lt.s32.totalorder %s867, 3
      %s869 = scalar_select %p868, %s867, 3
      %s870 = smul.addr %s869, 8
      %s871 = scalar_lea.vmem %s6, %s870
      // Predicated region
      $region45: #{basic_block_forward.1} parent=43 // pred_check
        %p872 = pneg %p166
      $region46: #{basic_block_forward.1} parent=43 // pred_check_branch
        %874 = sbr.rel (%p872) target = $region48
      $region47: #{basic_block_forward.1} parent=43 // pred_region
        %s875 = smul.u32 2, %s17
      $region48: #{basic_block_forward.1} parent=43 // pred_fallthru
        _
    $region44: #{basic_block_forward.1} parent=5 // pred_fallthru
      _
    %p876 = scmp.le.s32.totalorder 2, %s12
    // Predicated region
    $region49: #{basic_block_forward.1} parent=5 // pred_check
      %p877 = pneg %p876
    $region50: #{basic_block_forward.1} parent=5 // pred_check_branch
      %879 = sbr.rel (%p877) target = $region52
    $region51: #{basic_block_forward.1} parent=5 // pred_region
      %s880 = ssub.s32 %s12, 2
      // Predicated region
      $region53: #{basic_block_forward.1} parent=51 // pred_check
        %p881 = pneg %p172
      $region54: #{basic_block_forward.1} parent=51 // pred_check_branch
        %883 = sbr.rel (%p881) target = $region56
      $region55: #{basic_block_forward.1} parent=51 // pred_region
        %s884 = smul.u32 2, %s18
        %p885 = scmp.lt.s32.totalorder %s884, 3
        %s886 = scalar_select %p885, %s884, 3
        %s887 = smul.addr %s886, 8
        %s888 = scalar_lea.vmem %s6, %s887
      $region56: #{basic_block_forward.1} parent=51 // pred_fallthru
        _
    $region52: #{basic_block_forward.1} parent=5 // pred_fallthru
      _
  $region6: #{basic_block_forward.1} parent=0 // loop_footer
    %s16 = sadd.s32 1, %s12
  $region7: #{basic_block_forward.1} parent=0 // loop_footer_branch
    %11 = sbr.rel target = $region3
  $region8: #{basic_block_forward.1} parent=0 // loop_exit
    _

</llo_original>
